<compile_context>
chip_gen: v5e
topology: v5e:2x2
jax: 0.10.0
libtpu: 0.0.40
codegen_flags: <defaults>
</compile_context>

<pallas_src>
import math
import functools

import jax
import jax.numpy as jnp
from jax import lax
from jax.experimental import pallas as pl
from jax.experimental.pallas import tpu as pltpu

VAR_SIZE = 2
OUT_PAD = 128                        # lane-dense padded decoder width
_INV_SQRT2 = 1.0 / math.sqrt(2.0)    # precomputed constant (no divide in-kernel)

# Rows of the packed grid-invariant vector operand.
_ROW_DENSE_B, _ROW_LN_G, _ROW_LN_B = 0, 1, 2
_VEC_ROWS = 8


def _round_up(n, m):
    return ((n + m - 1) // m) * m


def _round_down(n, m):
    return (n // m) * m


# --------------------------------------------------------------------------
# Kernels
# --------------------------------------------------------------------------
def _epilogue(h, vecs, wdec, bdec, eps):
    """f32 epilogue: +bias, exact GELU, LayerNorm, decoder matmul (+bias)."""
    h = h + vecs[_ROW_DENSE_B:_ROW_DENSE_B + 1, :]

    # Exact (erf-based) GELU, matching transformers' gelu.
    h = 0.5 * h * (1.0 + lax.erf(h * jnp.float32(_INV_SQRT2)))

    # LayerNorm over the hidden axis -- two-pass (x - mu) variance for precision.
    inv_n = jnp.float32(1.0 / h.shape[-1])
    mu = jnp.sum(h, axis=-1, keepdims=True) * inv_n
    d = h - mu
    var = jnp.sum(d * d, axis=-1, keepdims=True) * inv_n
    hn = d * lax.rsqrt(var + jnp.float32(eps))
    hn = hn * vecs[_ROW_LN_G:_ROW_LN_G + 1, :] + vecs[_ROW_LN_B:_ROW_LN_B + 1, :]

    # Decoder (hidden -> VAR_SIZE padded to 128 lanes) + bias.
    return jnp.dot(hn.astype(jnp.bfloat16), wdec,
                   preferred_element_type=jnp.float32) + bdec


def _lm_head_fused_kernel(x_ref, wd_ref, vecs_ref, wdec_ref, bdec_ref, o_ref, *,
                          eps):
    """Resident-weight path: single matmul, no accumulator scratch."""
    # bf16 MXU operands, f32 accumulation (astype is a no-op for bf16 inputs).
    h = jnp.dot(x_ref[...].astype(jnp.bfloat16), wd_ref[...],
                preferred_element_type=jnp.float32)
    out = _epilogue(h, vecs_ref[...], wdec_ref[...], bdec_ref[...], eps)
    o_ref[...] = out.astype(o_ref.dtype)


def _lm_head_ktiled_kernel(x_ref, wd_ref, vecs_ref, wdec_ref, bdec_ref, o_ref,
                           acc_ref, *, eps):
    """K-tiled path: (tm, H) f32 accumulator across the hidden-in grid axis."""
    k = pl.program_id(1)

    @pl.when(k == 0)
    def _():
        acc_ref[...] = jnp.zeros_like(acc_ref)

    acc_ref[...] += jnp.dot(x_ref[...].astype(jnp.bfloat16), wd_ref[...],
                            preferred_element_type=jnp.float32)

    @pl.when(k == pl.num_programs(1) - 1)
    def _():
        out = _epilogue(acc_ref[...], vecs_ref[...], wdec_ref[...],
                        bdec_ref[...], eps)
        o_ref[...] = out.astype(o_ref.dtype)


# --------------------------------------------------------------------------
# One-time parameter prep (hoisted out of the per-call path)
# --------------------------------------------------------------------------
def prepare_params(params):
    """bf16 matmul weights, packed f32 bias/LN vectors, decoder weight/bias
    zero-padded to OUT_PAD lanes."""
    H = params["dense_w"].shape[0]
    vecs = jnp.zeros((_VEC_ROWS, H), jnp.float32)
    vecs = vecs.at[_ROW_DENSE_B].set(params["dense_b"].astype(jnp.float32))
    vecs = vecs.at[_ROW_LN_G].set(params["ln_g"].astype(jnp.float32))
    vecs = vecs.at[_ROW_LN_B].set(params["ln_b"].astype(jnp.float32))
    wdec = jnp.zeros((H, OUT_PAD), jnp.bfloat16).at[:, :VAR_SIZE].set(
        params["dec_w"].astype(jnp.bfloat16))
    bdec = jnp.zeros((1, OUT_PAD), jnp.float32).at[:, :VAR_SIZE].set(
        params["dec_b"].astype(jnp.float32))
    return {
        "dense_w": params["dense_w"].astype(jnp.bfloat16),   # (H, H), (in, out)
        "vecs": vecs,                                         # (8, H) f32
        "dec_w": wdec,                                        # (H, OUT_PAD) bf16
        "dec_b": bdec,                                        # (1, OUT_PAD) f32
    }


# --------------------------------------------------------------------------
# Generation-aware planning
# --------------------------------------------------------------------------
_GEN_CFG = {
    # vmem_cap : scoped-VMEM ceiling we are willing to request.
    # tm_res   : target row tile when the dense weight is VMEM-resident.
    # tm_kt    : target row tile for the K-tiled fallback (hides the per-step
    #            bf16 weight-slice DMA given each generation's HBM BW / MXU).
    "v5e": dict(vmem_cap=110 << 20, tm_res=512, tm_kt=384),
    "v6e": dict(vmem_cap=110 << 20, tm_res=512, tm_kt=704),
    "v7x": dict(vmem_cap=56 << 20,  tm_res=384, tm_kt=448),
}
_FLAVOR_DEFAULT_VMEM = {"v5e": 128 << 20, "v6e": 128 << 20, "v7x": 64 << 20}


def _tpu_flavor_and_vmem():
    kind = ""
    try:
        kind = (jax.devices()[0].device_kind or "").lower()
    except Exception:
        pass
    if "v7" in kind:
        flavor = "v7x"
    elif "v6" in kind:
        flavor = "v6e"
    elif "v5" in kind:
        flavor = "v5e"
    else:
        flavor = None

    vmem = None
    try:
        info = pltpu.get_tpu_info()
        for attr in ("vmem_capacity_bytes", "vmem_bytes", "vmem_size_bytes"):
            v = getattr(info, attr, None)
            if v:
                vmem = int(v)
                break
    except Exception:
        pass

    if flavor is None:
        # Unknown part: be conservative unless we can see a big VMEM.
        flavor = "v6e" if (vmem is not None and vmem > (64 << 20)) else "v7x"
    if vmem is None:
        vmem = _FLAVOR_DEFAULT_VMEM[flavor]
    return flavor, vmem


def _select_plan(N, H, x_itemsize, tm_user, tk_user):
    flavor, phys_vmem = _tpu_flavor_and_vmem()
    cfg = _GEN_CFG[flavor]
    cap = min(cfg["vmem_cap"], phys_vmem * 7 // 8)   # leave Mosaic headroom

    gran = 8 if x_itemsize >= 4 else 16              # sublane granularity of tm
    tm_cap = _round_down(N, gran) if N >= gran else N  # block never exceeds N

    fixed = (H * OUT_PAD * 2        # decoder weight (bf16, single-buffered)
             + _VEC_ROWS * H * 4    # packed bias / LN vectors
             + OUT_PAD * 4          # decoder bias
             + (2 << 20))           # headroom for Mosaic internal scratch

    def resident_bytes(tm):
        return (H * H * 2                      # dense weight bf16, single-buffered
                + 2 * tm * H * x_itemsize      # x tile, double-buffered
                + 2 * tm * OUT_PAD * 4         # output tile, double-buffered
                + fixed)

    def ktiled_bytes(tm, tk, wbuf):
        return (wbuf * tk * H * 2              # dense weight slice, bf16
                + 2 * tm * tk * x_itemsize     # x tile, double-buffered
                + tm * H * 4                   # f32 accumulator scratch
                + 2 * tm * OUT_PAD * 4         # output tile, double-buffered
                + fixed)

    def clamp_tm(target):
        if tm_cap < gran:
            return tm_cap                      # single full-extent row block
        return max(gran, min(_round_up(max(int(target), 1), gran), tm_cap))

    def vmem_budget(nbytes):
        return int(min(cap, max(nbytes, 8 << 20)))

    # ---- Plan A: whole dense weight resident in VMEM (no K axis, no scratch) ----
    if tk_user is None or tk_user >= H:
        tm = clamp_tm(tm_user if tm_user else cfg["tm_res"])
        avail = cap - (H * H * 2 + fixed)
        per_row = 2 * H * x_itemsize + 2 * OUT_PAD * 4
        tm_fit = _round_down(avail // per_row, gran) if avail > 0 else 0
        tm_a = min(tm, tm_fit) if tm_fit > 0 else 0
        # Accept the resident plan unless it forces an uselessly small row tile.
        if tm_a > 0 and tm_a >= min(128, tm_cap):
            return dict(kind="resident", flavor=flavor, tm=int(tm_a), tk=int(H),
                        wd_buf=1, vmem=vmem_budget(resident_bytes(tm_a)))

    # ---- Plan B: K-tiled dense weight + (tm, H) f32 accumulator scratch ----
    if tk_user is not None and 0 < tk_user < H and H % tk_user == 0:
        tk_cands = [int(tk_user)]
    else:
        tk_cands = [c for c in (2048, 1024, 512, 256, 128) if H % c == 0 and c < H]
    wbufs = (3, 2) if flavor == "v6e" else (2,)      # 3-deep weight pipe on v6e
    tm = clamp_tm(tm_user if tm_user else cfg["tm_kt"])
    while tm >= gran and tk_cands:
        for wbuf in wbufs:
            for tk in tk_cands:
                if ktiled_bytes(tm, tk, wbuf) <= cap:
                    return dict(kind="ktiled", flavor=flavor, tm=int(tm),
                                tk=int(tk), wd_buf=int(wbuf),
                                vmem=vmem_budget(ktiled_bytes(tm, tk, wbuf)))
        tm = _round_down(tm // 2, gran)

    # ---- Fallback: best-effort resident plan (e.g. H not a multiple of 128). ----
    # TODO(synk): ragged hidden sizes that do not fit VMEM resident would need a
    # padded-K tiling; not required for standard RoBERTa hidden sizes.
    avail = cap - (H * H * 2 + fixed)
    per_row = 2 * H * x_itemsize + 2 * OUT_PAD * 4
    tm = _round_down(max(avail, 0) // per_row, gran)
    tm = max(min(gran, tm_cap), min(tm, tm_cap))
    return dict(kind="resident", flavor=flavor, tm=int(tm), tk=int(H), wd_buf=1,
                vmem=vmem_budget(resident_bytes(tm)))


# --------------------------------------------------------------------------
# Wrapper
# --------------------------------------------------------------------------
def roberta_lm_head3(features, prepped, *, eps=1e-5, tm=None, tk=None):
    """features: (..., H) float32 or bfloat16; prepped: output of prepare_params.
    Returns (..., VAR_SIZE) in the activation dtype."""
    orig_shape = features.shape
    H = orig_shape[-1]
    x = features.reshape(-1, H)
    if x.dtype != jnp.float32 and x.dtype != jnp.bfloat16:
        x = x.astype(jnp.float32)
    # NOTE: f32 inputs stay f32 in HBM (no extra wrapper cast pass); the cast to
    # bf16 MXU operands happens on the VMEM tile inside the kernel.
    N = x.shape[0]
    out_dtype = x.dtype

    plan = _select_plan(N, H, x.dtype.itemsize, tm, tk)
    tm_ = plan["tm"]
    n_rows = pl.cdiv(N, tm_)

    wd = prepped["dense_w"]
    vecs = prepped["vecs"]
    wdec = prepped["dec_w"]
    bdec = prepped["dec_b"]

    def invariant(shape, index_map):
        # Grid-invariant operand: single-buffered (halves its VMEM footprint).
        return pl.BlockSpec(shape, index_map,
                            pipeline_mode=pl.Buffered(buffer_count=1))

    if plan["kind"] == "resident":
        grid = (n_rows,)
        in_specs = [
            pl.BlockSpec((tm_, H), lambda i: (i, 0)),            # x
            invariant((H, H), lambda i: (0, 0)),                 # dense weight
            invariant((_VEC_ROWS, H), lambda i: (0, 0)),         # bias / LN vecs
            invariant((H, OUT_PAD), lambda i: (0, 0)),           # decoder weight
            invariant((1, OUT_PAD), lambda i: (0, 0)),           # decoder bias
        ]
        out_specs = pl.BlockSpec((tm_, OUT_PAD), lambda i: (i, 0))
        scratch_shapes = []
        kernel = functools.partial(_lm_head_fused_kernel, eps=eps)
        dim_sem = ("parallel",)
        wd_reads = 1
    else:
        tk_ = plan["tk"]
        n_k = H // tk_
        grid = (n_rows, n_k)
        in_specs = [
            pl.BlockSpec((tm_, tk_), lambda i, k: (i, k)),       # x
            pl.BlockSpec((tk_, H), lambda i, k: (k, 0),          # dense weight slice
                         pipeline_mode=pl.Buffered(buffer_count=plan["wd_buf"])),
            invariant((_VEC_ROWS, H), lambda i, k: (0, 0)),      # bias / LN vecs
            invariant((H, OUT_PAD), lambda i, k: (0, 0)),        # decoder weight
            invariant((1, OUT_PAD), lambda i, k: (0, 0)),        # decoder bias
        ]
        out_specs = pl.BlockSpec((tm_, OUT_PAD), lambda i, k: (i, 0))
        scratch_shapes = [pltpu.VMEM((tm_, H), jnp.float32)]
        kernel = functools.partial(_lm_head_ktiled_kernel, eps=eps)
        dim_sem = ("parallel", "arbitrary")
        wd_reads = n_rows   # weight re-streamed once per row tile

    cost = pl.CostEstimate(
        flops=int(2 * N * H * H + 2 * N * H * OUT_PAD + 10 * N * H),
        transcendentals=int(N * H),
        bytes_accessed=int(N * H * x.dtype.itemsize
                           + wd_reads * H * H * 2
                           + H * OUT_PAD * 2
                           + _VEC_ROWS * H * 4 + OUT_PAD * 4
                           + N * OUT_PAD * out_dtype.itemsize),
    )

    out_padded = pl.pallas_call(
        kernel,
        out_shape=jax.ShapeDtypeStruct((N, OUT_PAD), out_dtype),
        grid_spec=pltpu.PrefetchScalarGridSpec(
            num_scalar_prefetch=0,
            grid=grid,
            in_specs=in_specs,
            out_specs=out_specs,
            scratch_shapes=scratch_shapes,
        ),
        compiler_params=pltpu.CompilerParams(
            dimension_semantics=dim_sem,
            vmem_limit_bytes=int(plan["vmem"]),
        ),
        cost_estimate=cost,
    )(x, wd, vecs, wdec, bdec)

    out = out_padded[:, :VAR_SIZE]
    return out.reshape(orig_shape[:-1] + (VAR_SIZE,))


# --------------------------------------------------------------------------
# Params / reference / demo
# --------------------------------------------------------------------------
def init_params(key, hidden_size):
    k1, k2, k3 = jax.random.split(key, 3)
    scale = 1.0 / math.sqrt(hidden_size)
    return {
        # stored as (in, out) = transposed PyTorch Linear weight
        "dense_w": jax.random.normal(k1, (hidden_size, hidden_size), jnp.float32) * scale,
        "dense_b": jax.random.normal(k2, (hidden_size,), jnp.float32) * 0.02,
        "ln_g": jnp.ones((hidden_size,), jnp.float32),
        "ln_b": jnp.zeros((hidden_size,), jnp.float32),
        "dec_w": jax.random.normal(k3, (hidden_size, VAR_SIZE), jnp.float32) * scale,
        # decoder.bias is nn.Parameter(torch.zeros(VAR_SIZE))
        "dec_b": jnp.zeros((VAR_SIZE,), jnp.float32),
    }


def _reference(features, params, eps=1e-5):
    x = features @ params["dense_w"] + params["dense_b"]
    x = 0.5 * x * (1.0 + lax.erf(x * jnp.float32(_INV_SQRT2)))
    mu = jnp.mean(x, axis=-1, keepdims=True)
    var = jnp.mean((x - mu) ** 2, axis=-1, keepdims=True)
    x = (x - mu) * lax.rsqrt(var + eps) * params["ln_g"] + params["ln_b"]
    return x @ params["dec_w"] + params["dec_b"]


if __name__ == "__main__":
    key = jax.random.PRNGKey(0)
    batch, seq, hidden = 2, 8, 32
    kf, kp = jax.random.split(key)
    features = jax.random.normal(kf, (batch, seq, hidden), jnp.float32)
    params = init_params(kp, hidden)
    prepped = prepare_params(params)

    out = roberta_lm_head3(features, prepped, eps=1e-5)
    out = jax.block_until_ready(out)

    ref = _reference(features, params, eps=1e-5)
    assert out.shape == (batch, seq, VAR_SIZE)
    # bf16 MXU operands with f32 accumulation -> relaxed tolerance vs f32 reference.
    assert jnp.allclose(out, ref, atol=5e-2, rtol=5e-2), \
        float(jnp.max(jnp.abs(out - ref)))
    print("KERNEL_OK")
</pallas_src>

<mosaic_0001>
module attributes {stable_mosaic.version = 11 : i64} {
  func.func @_lm_head_fused_kernel(%arg0: i32, %arg1: memref<16x32xf32, #tpu.memory_space<vmem>>, %arg2: memref<32x32xbf16, #tpu.memory_space<vmem>>, %arg3: memref<8x32xf32, #tpu.memory_space<vmem>>, %arg4: memref<32x128xbf16, #tpu.memory_space<vmem>>, %arg5: memref<1x128xf32, #tpu.memory_space<vmem>>, %arg6: memref<16x128xf32, #tpu.memory_space<vmem>>) attributes {dimension_semantics = [#tpu.dimension_semantics<parallel>], iteration_bounds = array<i64: 1>, scalar_prefetch = 0 : i64, scratch_operands = 0 : i64, tpu.core_type = #tpu.core_type<tc>, window_params = [{transform_indices = @transform_0, window_bounds = array<i64: 16, 32>}, {pipeline_mode = #tpu.pipeline_mode<synchronous>, transform_indices = @transform_1, window_bounds = array<i64: 32, 32>}, {pipeline_mode = #tpu.pipeline_mode<synchronous>, transform_indices = @transform_2, window_bounds = array<i64: 8, 32>}, {pipeline_mode = #tpu.pipeline_mode<synchronous>, transform_indices = @transform_3, window_bounds = array<i64: 32, 128>}, {pipeline_mode = #tpu.pipeline_mode<synchronous>, transform_indices = @transform_4, window_bounds = array<i64: 1, 128>}, {transform_indices = @transform_5, window_bounds = array<i64: 16, 128>}]} {
    %c0 = arith.constant 0 : index
    %c0_0 = arith.constant 0 : index
    %0 = vector.load %arg1[%c0, %c0_0] : memref<16x32xf32, #tpu.memory_space<vmem>>, vector<16x32xf32>
    %1 = arith.truncf %0 : vector<16x32xf32> to vector<16x32xbf16>
    %c0_1 = arith.constant 0 : index
    %c0_2 = arith.constant 0 : index
    %2 = vector.load %arg2[%c0_1, %c0_2] : memref<32x32xbf16, #tpu.memory_space<vmem>>, vector<32x32xbf16>
    %cst = arith.constant dense<0.000000e+00> : vector<16x32xf32>
    %3 = tpu.matmul %1, %2, %cst {dimension_numbers = #tpu.dot_dimension_numbers<[1], [0], [0], [1], [0, 0, 1, 1], [], []>} : vector<16x32xbf16>, vector<32x32xbf16>, vector<16x32xf32> -> vector<16x32xf32>
    %c0_3 = arith.constant 0 : index
    %c0_4 = arith.constant 0 : index
    %4 = vector.load %arg3[%c0_3, %c0_4] : memref<8x32xf32, #tpu.memory_space<vmem>>, vector<8x32xf32>
    %c0_5 = arith.constant 0 : index
    %c0_6 = arith.constant 0 : index
    %5 = vector.load %arg4[%c0_5, %c0_6] : memref<32x128xbf16, #tpu.memory_space<vmem>>, vector<32x128xbf16>
    %c0_7 = arith.constant 0 : index
    %c0_8 = arith.constant 0 : index
    %6 = vector.load %arg5[%c0_7, %c0_8] : memref<1x128xf32, #tpu.memory_space<vmem>>, vector<1x128xf32>
    %7 = vector.extract_strided_slice %4 {offsets = [0, 0], sizes = [1, 32], strides = [1, 1]} : vector<8x32xf32> to vector<1x32xf32>
    %8 = vector.broadcast %7 : vector<1x32xf32> to vector<16x32xf32>
    %9 = arith.addf %3, %8 : vector<16x32xf32>
    %cst_9 = arith.constant 5.000000e-01 : f32
    %10 = vector.broadcast %cst_9 : f32 to vector<16x32xf32>
    %11 = arith.mulf %10, %9 : vector<16x32xf32>
    %cst_10 = arith.constant 0.707106769 : f32
    %12 = vector.broadcast %cst_10 : f32 to vector<16x32xf32>
    %13 = arith.mulf %9, %12 : vector<16x32xf32>
    %14 = math.erf %13 : vector<16x32xf32>
    %cst_11 = arith.constant 1.000000e+00 : f32
    %15 = vector.broadcast %cst_11 : f32 to vector<16x32xf32>
    %16 = arith.addf %15, %14 : vector<16x32xf32>
    %17 = arith.mulf %11, %16 : vector<16x32xf32>
    %cst_12 = arith.constant dense<0.000000e+00> : vector<16xf32>
    %18 = vector.multi_reduction <add>, %17, %cst_12 [1] : vector<16x32xf32> to vector<16xf32>
    %19 = vector.shape_cast %18 : vector<16xf32> to vector<16x1xf32>
    %cst_13 = arith.constant 3.125000e-02 : f32
    %20 = vector.broadcast %cst_13 : f32 to vector<16x1xf32>
    %21 = arith.mulf %19, %20 : vector<16x1xf32>
    %22 = vector.broadcast %21 : vector<16x1xf32> to vector<16x32xf32>
    %23 = arith.subf %17, %22 : vector<16x32xf32>
    %24 = arith.mulf %23, %23 : vector<16x32xf32>
    %cst_14 = arith.constant dense<0.000000e+00> : vector<16xf32>
    %25 = vector.multi_reduction <add>, %24, %cst_14 [1] : vector<16x32xf32> to vector<16xf32>
    %26 = vector.shape_cast %25 : vector<16xf32> to vector<16x1xf32>
    %cst_15 = arith.constant 3.125000e-02 : f32
    %27 = vector.broadcast %cst_15 : f32 to vector<16x1xf32>
    %28 = arith.mulf %26, %27 : vector<16x1xf32>
    %cst_16 = arith.constant 9.99999974E-6 : f32
    %29 = vector.broadcast %cst_16 : f32 to vector<16x1xf32>
    %30 = arith.addf %28, %29 : vector<16x1xf32>
    %31 = math.rsqrt %30 : vector<16x1xf32>
    %32 = vector.broadcast %31 : vector<16x1xf32> to vector<16x32xf32>
    %33 = arith.mulf %23, %32 : vector<16x32xf32>
    %34 = vector.extract_strided_slice %4 {offsets = [1, 0], sizes = [1, 32], strides = [1, 1]} : vector<8x32xf32> to vector<1x32xf32>
    %35 = vector.broadcast %34 : vector<1x32xf32> to vector<16x32xf32>
    %36 = arith.mulf %33, %35 : vector<16x32xf32>
    %37 = vector.extract_strided_slice %4 {offsets = [2, 0], sizes = [1, 32], strides = [1, 1]} : vector<8x32xf32> to vector<1x32xf32>
    %38 = vector.broadcast %37 : vector<1x32xf32> to vector<16x32xf32>
    %39 = arith.addf %36, %38 : vector<16x32xf32>
    %40 = arith.truncf %39 : vector<16x32xf32> to vector<16x32xbf16>
    %cst_17 = arith.constant dense<0.000000e+00> : vector<16x128xf32>
    %41 = tpu.matmul %40, %5, %cst_17 {dimension_numbers = #tpu.dot_dimension_numbers<[1], [0], [0], [1], [0, 0, 1, 1], [], []>} : vector<16x32xbf16>, vector<32x128xbf16>, vector<16x128xf32> -> vector<16x128xf32>
    %42 = vector.broadcast %6 : vector<1x128xf32> to vector<16x128xf32>
    %43 = arith.addf %41, %42 : vector<16x128xf32>
    %c0_18 = arith.constant 0 : index
    %c0_19 = arith.constant 0 : index
    %44 = vector.load %arg6[%c0_18, %c0_19] : memref<16x128xf32, #tpu.memory_space<vmem>>, vector<16x128xf32>
    tpu.vector_store %arg6[%c0_18, %c0_19], %43 {strides = array<i32>} : memref<16x128xf32, #tpu.memory_space<vmem>>, vector<16x128xf32>,
    return
  }
  func.func @transform_0(%arg0: i32) -> (i32, i32) {
    %c0_i32 = arith.constant 0 : i32
    %c0_i32_0 = arith.constant 0 : i32
    return %arg0, %c0_i32 : i32, i32
  }
  func.func @transform_1(%arg0: i32) -> (i32, i32) {
    %c0_i32 = arith.constant 0 : i32
    %c0_i32_0 = arith.constant 0 : i32
    %c0_i32_1 = arith.constant 0 : i32
    return %c0_i32, %c0_i32_0 : i32, i32
  }
  func.func @transform_2(%arg0: i32) -> (i32, i32) {
    %c0_i32 = arith.constant 0 : i32
    %c0_i32_0 = arith.constant 0 : i32
    %c0_i32_1 = arith.constant 0 : i32
    return %c0_i32, %c0_i32_0 : i32, i32
  }
  func.func @transform_3(%arg0: i32) -> (i32, i32) {
    %c0_i32 = arith.constant 0 : i32
    %c0_i32_0 = arith.constant 0 : i32
    %c0_i32_1 = arith.constant 0 : i32
    return %c0_i32, %c0_i32_0 : i32, i32
  }
  func.func @transform_4(%arg0: i32) -> (i32, i32) {
    %c0_i32 = arith.constant 0 : i32
    %c0_i32_0 = arith.constant 0 : i32
    %c0_i32_1 = arith.constant 0 : i32
    return %c0_i32, %c0_i32_0 : i32, i32
  }
  func.func @transform_5(%arg0: i32) -> (i32, i32) {
    %c0_i32 = arith.constant 0 : i32
    %c0_i32_0 = arith.constant 0 : i32
    return %arg0, %c0_i32 : i32, i32
  }
}

</mosaic_0001>

<llo_original>
// kernel: tpu_custom_call.1
$region0: #{tpu_custom_call.1}
  #allocation0 [shape = 'u32[]', space=smem, size = 0x4, offset = 0x4, fixed_abs, tag = 'smem constant byte address 0x4 - core index']
  #allocation1 [shape = 'u32[72,128]{1,0:T(1,128)}', space=vmem, size = 0x9000, scoped, tag = 'internal scratch']
  %s0 = inlined_call_operand.hbm [shape: f32[16,32], index: 0, kind: input, shape index: {}]
  %s1 = inlined_call_operand.hbm [shape: bf16[32,32], index: 1, kind: input, shape index: {}]
  %s2 = inlined_call_operand.hbm [shape: f32[8,32], index: 2, kind: input, shape index: {}]
  %s3 = inlined_call_operand.hbm [shape: bf16[32,128], index: 3, kind: input, shape index: {}]
  %s4 = inlined_call_operand.vmem [shape: f32[1,128], index: 4, kind: input, shape index: {}]
  %s5 = inlined_call_operand.hbm [shape: f32[16,128], index: 5, kind: output, shape index: {}]
  %s6 = sld [smem:[#allocation0]]
  $region46: #{tpu_custom_call.1} parent=0
    _
  %s8 = ssub.s32 1, %s6
  %s9 = scalar_select 0, %s8, %s6
  $region1: #{tpu_custom_call.1} parent=0
    #allocation2 [shape = 'u8[8192]{0}', space=vmem, size = 0x2000, scoped, tag = 'input window, operand 0, single buffered']
    #allocation3 [shape = 's32[1]{0}', space=sflag, size = 0x4, scoped, tag = 'scoped memory for tpu_custom_call.1']
    #allocation4 [shape = 's32[1]{0}', space=sflag, size = 0x4, scoped, tag = 'scoped memory for tpu_custom_call.1']
    #allocation5 [shape = 'u8[8192]{0}', space=vmem, size = 0x2000, scoped, tag = 'input window, operand 1, single buffered']
    #allocation6 [shape = 's32[1]{0}', space=sflag, size = 0x4, scoped, tag = 'scoped memory for tpu_custom_call.1']
    #allocation7 [shape = 'u8[4096]{0}', space=vmem, size = 0x1000, scoped, tag = 'input window, operand 2, single buffered']
    #allocation8 [shape = 'u8[8192]{0}', space=vmem, size = 0x2000, scoped, tag = 'input window, operand 3, single buffered']
    #allocation9 [shape = 's32[1]{0}', space=sflag, size = 0x4, scoped, tag = 'scoped memory for tpu_custom_call.1']
    #allocation10 [shape = 'u8[8192]{0}', space=vmem, size = 0x2000, scoped, tag = 'output window, operand 0, single buffered']
    %10 = vsyncpa [#allocation3], 0
    %11 = vsyncpa [#allocation6], 0
    %12 = vsyncpa [#allocation9], 0
    %13 = vsyncpa [#allocation4], 0
    // Predicated region
    $region2: #{tpu_custom_call.1} parent=1 // pred_check
      _
    $region3: #{tpu_custom_call.1} parent=1 // pred_check_branch
      %15 = sbr.rel (0) target = $region5
    $region4: #{tpu_custom_call.1} parent=1 // pred_region
      %17 = vsyncadd [#allocation3], 0
      %s18 = sshll.u32 %s0, 4
      %s19 = int_to_ptr.hbm [resolvable:$true] %s18
      %s20 = sshll.u32 [#allocation2], 4
      %s21 = int_to_ptr.vmem [resolvable:$true] %s20
      %26 = dma.hbm_to_vmem [thread:$0]  %s19, 256, %s21, [#allocation3], 128, 128, 8
    $region5: #{tpu_custom_call.1} parent=1 // pred_fallthru
      _
    // Predicated region
    $region6: #{tpu_custom_call.1} parent=1 // pred_check
      _
    $region7: #{tpu_custom_call.1} parent=1 // pred_check_branch
      %28 = sbr.rel (0) target = $region9
    $region8: #{tpu_custom_call.1} parent=1 // pred_region
      %30 = vsyncadd [#allocation6], 0
      %s31 = sshll.u32 %s1, 4
      %s32 = int_to_ptr.hbm [resolvable:$true] %s31
      %s33 = sshll.u32 [#allocation5], 4
      %s34 = int_to_ptr.vmem [resolvable:$true] %s33
      %39 = dma.hbm_to_vmem [thread:$0]  %s32, 256, %s34, [#allocation6], 64, 64, 4
    $region9: #{tpu_custom_call.1} parent=1 // pred_fallthru
      _
    // Predicated region
    $region10: #{tpu_custom_call.1} parent=1 // pred_check
      _
    $region11: #{tpu_custom_call.1} parent=1 // pred_check_branch
      %41 = sbr.rel (0) target = $region13
    $region12: #{tpu_custom_call.1} parent=1 // pred_region
      %43 = vsyncadd [#allocation6], 0
      %s45 = sshll.u32 %s2, 4
      %s46 = int_to_ptr.hbm [resolvable:$true] %s45
      %s47 = sshll.u32 [#allocation7], 4
      %s48 = int_to_ptr.vmem [resolvable:$true] %s47
      %50 = dma.hbm_to_vmem [thread:$0]  %s46, 128, %s48, [#allocation6]
    $region13: #{tpu_custom_call.1} parent=1 // pred_fallthru
      _
    // Predicated region
    $region14: #{tpu_custom_call.1} parent=1 // pred_check
      _
    $region15: #{tpu_custom_call.1} parent=1 // pred_check_branch
      %52 = sbr.rel (0) target = $region17
    $region16: #{tpu_custom_call.1} parent=1 // pred_region
      %54 = vsyncadd [#allocation9], 0
      %s55 = sshll.u32 %s3, 4
      %s56 = int_to_ptr.hbm [resolvable:$true] %s55
      %s57 = sshll.u32 [#allocation8], 4
      %s58 = int_to_ptr.vmem [resolvable:$true] %s57
      %63 = dma.hbm_to_vmem [thread:$0]  %s56, 256, %s58, [#allocation9], 64, 64, 4
    $region17: #{tpu_custom_call.1} parent=1 // pred_fallthru
      _
    // Predicated region
    $region18: #{tpu_custom_call.1} parent=1 // pred_check
      _
    $region19: #{tpu_custom_call.1} parent=1 // pred_check_branch
      %65 = sbr.rel (0) target = $region21
    $region20: #{tpu_custom_call.1} parent=1 // pred_region
      _
    $region21: #{tpu_custom_call.1} parent=1 // pred_fallthru
      _
    // Predicated region
    $region22: #{tpu_custom_call.1} parent=1 // pred_check
      _
    $region23: #{tpu_custom_call.1} parent=1 // pred_check_branch
      %67 = sbr.rel (0) target = $region25
    $region24: #{tpu_custom_call.1} parent=1 // pred_region
      %69 = dma.done [#allocation3], 256
    $region25: #{tpu_custom_call.1} parent=1 // pred_fallthru
      _
    // Predicated region
    $region26: #{tpu_custom_call.1} parent=1 // pred_check
      _
    $region27: #{tpu_custom_call.1} parent=1 // pred_check_branch
      %71 = sbr.rel (0) target = $region29
    $region28: #{tpu_custom_call.1} parent=1 // pred_region
      %73 = dma.done [#allocation6], 256
    $region29: #{tpu_custom_call.1} parent=1 // pred_fallthru
      _
    // Predicated region
    $region30: #{tpu_custom_call.1} parent=1 // pred_check
      _
    $region31: #{tpu_custom_call.1} parent=1 // pred_check_branch
      %75 = sbr.rel (0) target = $region33
    $region32: #{tpu_custom_call.1} parent=1 // pred_region
      %77 = dma.done [#allocation6], 128
    $region33: #{tpu_custom_call.1} parent=1 // pred_fallthru
      _
    // Predicated region
    $region34: #{tpu_custom_call.1} parent=1 // pred_check
      _
    $region35: #{tpu_custom_call.1} parent=1 // pred_check_branch
      %79 = sbr.rel (0) target = $region37
    $region36: #{tpu_custom_call.1} parent=1 // pred_region
      %81 = dma.done [#allocation9], 256
    $region37: #{tpu_custom_call.1} parent=1 // pred_fallthru
      _
    %v83 = vld [vmem:[#allocation2] sm:$0xff]
    %v84 = vld [vmem:[#allocation2 + $0x8] sm:$0xff]
    %v85 = vpack.c.bf16 %v84, %v83
    %v86 = vld [vmem:[#allocation5] sm:$0xf]
    %v87 = vld [vmem:[#allocation5 + $0x4] sm:$0xf]
    %v88 = vld [vmem:[#allocation5 + $0x8] sm:$0xf]
    %v89 = vld [vmem:[#allocation5 + $0xc] sm:$0xf]
    %v90 = vld [vmem:[#allocation7] sm:$0xff]
    %v91 = vld [vmem:[#allocation8] sm:$0xf]
    %v92 = vld [vmem:[#allocation8 + $0x4] sm:$0xf]
    %v93 = vld [vmem:[#allocation8 + $0x8] sm:$0xf]
    %v94 = vld [vmem:[#allocation8 + $0xc] sm:$0xf]
    %v95 = vld [vmem:[%s4] sm:$0x1]
    %v96 = vperm.slane %v90, 0
    %v101 = vunpack.c.l.b16 %v86
    %v102 = vunpack.c.l.b16 %v87
    %v103 = vunpack.c.l.b16 %v88
    %v104 = vunpack.c.l.b16 %v89
    %v105 = vpack.c.b16 %v102, %v101
    %v106 = vpack.c.b16 %v104, %v103
    %vm109 = vcmask 261120
    %v111 = vsel %vm109, %v85, 0
    %113 = vmatpush.bf16.msra.mxu0 0
    %114 = vmatpush.bf16.msra.mxu0 0
    %115 = vmatpush.bf16.msra.mxu0 0
    %116 = vmatpush.bf16.msra.mxu0 0
    %117 = vmatpush.bf16.msra.mxu0 0
    %118 = vmatpush.bf16.msra.mxu0 0
    %119 = vmatpush.bf16.msra.mxu0 %v106
    %120 = vmatpush.bf16.msra.mxu0 %v105
    %121 = vmatmul.bf16.gmra.mxu0 %v111
    %v122 = vpop.f32.mrf.mxu0
    %v123 = vadd.f32 %v96, %v122
    %v124 = vpop.f32.mrf.mxu0
    %v125 = vadd.f32 %v96, %v124
    %126 = vdwg.mxu0
    %v127 = vmul.f32 %v123, 0.5
    %v128 = vmul.f32 %v125, 0.5
    %v129 = vmul.f32 %v123, 0.70710677
    %v130 = vmul.f32 %v125, 0.70710677
    %v131 = vmul.f32 %v129, %v129
    %v132 = vmin.f32 16.0, %v131
    %v133 = vmul.f32 %v132, 2.1237322e-06
    %v134 = vadd.f32 %v133, 0.00028619796
    %v135 = vmul.f32 %v132, %v134
    %v136 = vadd.f32 %v135, 0.0036580483
    %v137 = vmul.f32 %v132, %v136
    %v138 = vadd.f32 %v137, 0.05243302
    %v139 = vmul.f32 %v132, %v138
    %v140 = vadd.f32 %v139, 0.18741608
    %v141 = vmul.f32 %v132, %v140
    %v142 = vadd.f32 %v141, 1.1283791
    %v143 = vmul.f32 %v129, %v142
    %v144 = vmul.f32 %v132, 3.8918573e-05
    %v145 = vadd.f32 %v144, 0.001143296
    %v146 = vmul.f32 %v132, %v145
    %v147 = vadd.f32 %v146, 0.014752088
    %v148 = vmul.f32 %v132, %v147
    %v149 = vadd.f32 %v148, 0.112945676
    %v150 = vmul.f32 %v132, %v149
    %v151 = vadd.f32 %v150, 0.4994258
    %v152 = vmul.f32 %v132, %v151
    %v153 = vadd.f32 %v152, 1.0
    %v154 = vrcp.pop %v153
    %v155 = vmul.f32 %v153, %v154
    %v156 = vsub.f32 1.0, %v155
    %v157 = vmul.f32 %v154, %v156
    %v158 = vadd.f32 %v154, %v157
    %vm159 = vweird.f32 %v153
    %vm160 = vweird.f32 %v154
    %vm161 = vmor %vm159, %vm160
    %v162 = vsel %vm161, %v154, %v158
    %v163 = vand.u32 2147483647, %v153
    %vm164 = vcmp.eq.f32.partialorder %v163, 8.507059e+37
    %v165 = vand.u32 %v153, 2147483648
    %v166 = vor.u32 1.1754944e-38, %v165
    %v167 = vsel %vm164, %v166, %v162
    %v168 = vmul.f32 %v143, %v167
    %v169 = vmin.f32 %v168, 1.0
    %v170 = vmax.f32 %v169, -1.0
    %v171 = vmul.f32 %v130, %v130
    %v172 = vmin.f32 16.0, %v171
    %v173 = vmul.f32 %v172, 2.1237322e-06
    %v174 = vadd.f32 %v173, 0.00028619796
    %v175 = vmul.f32 %v172, %v174
    %v176 = vadd.f32 %v175, 0.0036580483
    %v177 = vmul.f32 %v172, %v176
    %v178 = vadd.f32 %v177, 0.05243302
    %v179 = vmul.f32 %v172, %v178
    %v180 = vadd.f32 %v179, 0.18741608
    %v181 = vmul.f32 %v172, %v180
    %v182 = vadd.f32 %v181, 1.1283791
    %v183 = vmul.f32 %v130, %v182
    %v184 = vmul.f32 %v172, 3.8918573e-05
    %v185 = vadd.f32 %v184, 0.001143296
    %v186 = vmul.f32 %v172, %v185
    %v187 = vadd.f32 %v186, 0.014752088
    %v188 = vmul.f32 %v172, %v187
    %v189 = vadd.f32 %v188, 0.112945676
    %v190 = vmul.f32 %v172, %v189
    %v191 = vadd.f32 %v190, 0.4994258
    %v192 = vmul.f32 %v172, %v191
    %v193 = vadd.f32 %v192, 1.0
    %v194 = vrcp.pop %v193
    %v195 = vmul.f32 %v193, %v194
    %v196 = vsub.f32 1.0, %v195
    %v197 = vmul.f32 %v194, %v196
    %v198 = vadd.f32 %v194, %v197
    %vm199 = vweird.f32 %v193
    %vm200 = vweird.f32 %v194
    %vm201 = vmor %vm199, %vm200
    %v202 = vsel %vm201, %v194, %v198
    %v203 = vand.u32 2147483647, %v193
    %vm204 = vcmp.eq.f32.partialorder %v203, 8.507059e+37
    %v205 = vand.u32 %v193, 2147483648
    %v206 = vor.u32 1.1754944e-38, %v205
    %v207 = vsel %vm204, %v206, %v202
    %v208 = vmul.f32 %v183, %v207
    %v209 = vmin.f32 %v208, 1.0
    %v210 = vmax.f32 %v209, -1.0
    %v211 = vadd.f32 %v170, 1.0
    %v212 = vadd.f32 %v210, 1.0
    %v213 = vmul.f32 %v127, %v211
    %v214 = vmul.f32 %v128, %v212
    %v215 = vsel %vm109, %v213, 0.0
    %216 = vadd.xlane.f32.xlu0 %v215
    %v217 = vpop.xlane.xlu0 %216
    %v218 = vsel %vm109, %v214, 0.0
    %219 = vadd.xlane.f32.xlu0 %v218
    %v220 = vpop.xlane.xlu0 %219
    %v221 = vmul.f32 %v217, 0.03125
    %v222 = vmul.f32 %v220, 0.03125
    %v223 = vsub.f32 %v213, %v221
    %v224 = vsub.f32 %v214, %v222
    %v225 = vmul.f32 %v223, %v223
    %v226 = vmul.f32 %v224, %v224
    %v227 = vsel %vm109, %v225, 0.0
    %228 = vadd.xlane.f32.xlu0 %v227
    %v229 = vpop.xlane.xlu0 %228
    %v230 = vsel %vm109, %v226, 0.0
    %231 = vadd.xlane.f32.xlu0 %v230
    %v232 = vpop.xlane.xlu0 %231
    %v233 = vmul.f32 %v229, 0.03125
    %v234 = vmul.f32 %v232, 0.03125
    %v235 = vadd.f32 %v233, 1e-05
    %v236 = vadd.f32 %v234, 1e-05
    %v237 = vrsqrt.pop %v235
    %v238 = vmul.f32 %v237, %v235
    %v239 = vmul.f32 %v238, %v237
    %v240 = vmul.f32 0.5, %v239
    %v241 = vsub.f32 1.5, %v240
    %v242 = vmul.f32 %v237, %v241
    %vm243 = vweird.f32 %v235
    %vm244 = vweird.f32 %v237
    %vm245 = vmor %vm243, %vm244
    %v246 = vsel %vm245, %v237, %v242
    %v247 = vrsqrt.pop %v236
    %v248 = vmul.f32 %v247, %v236
    %v249 = vmul.f32 %v248, %v247
    %v250 = vmul.f32 0.5, %v249
    %v251 = vsub.f32 1.5, %v250
    %v252 = vmul.f32 %v247, %v251
    %vm253 = vweird.f32 %v236
    %vm254 = vweird.f32 %v247
    %vm255 = vmor %vm253, %vm254
    %v256 = vsel %vm255, %v247, %v252
    %v257 = vmul.f32 %v223, %v246
    %v258 = vmul.f32 %v224, %v256
    %v259 = vperm.slane %v90, 1
    %v260 = vmul.f32 %v257, %v259
    %v261 = vmul.f32 %v258, %v259
    %v262 = vperm.slane %v90, 2
    %v263 = vadd.f32 %v260, %v262
    %v264 = vadd.f32 %v261, %v262
    %v265 = vpack.c.bf16 %v264, %v263
    %v267 = vperm.slane %v95, 0
    %v273 = vunpack.c.l.b16 %v91
    %v274 = vunpack.c.l.b16 %v92
    %v275 = vunpack.c.l.b16 %v93
    %v276 = vunpack.c.l.b16 %v94
    %v277 = vpack.c.b16 %v274, %v273
    %v278 = vpack.c.b16 %v276, %v275
    %v282 = vsel %vm109, %v265, 0
    %284 = vmatpush.bf16.msra.mxu0 0
    %285 = vmatpush.bf16.msra.mxu0 0
    %286 = vmatpush.bf16.msra.mxu0 0
    %287 = vmatpush.bf16.msra.mxu0 0
    %288 = vmatpush.bf16.msra.mxu0 0
    %289 = vmatpush.bf16.msra.mxu0 0
    %290 = vmatpush.bf16.msra.mxu0 %v278
    %291 = vmatpush.bf16.msra.mxu0 %v277
    %292 = vmatmul.bf16.gmra.mxu0 %v282
    %v293 = vpop.f32.mrf.mxu0
    %v294 = vadd.f32 %v267, %v293
    %v295 = vpop.f32.mrf.mxu0
    %v296 = vadd.f32 %v267, %v295
    %297 = vdwg.mxu0
    %298 = vst [vmem:[#allocation10] sm:$0xff] %v294
    %299 = vst [vmem:[#allocation10 + $0x8] sm:$0xff] %v296
    // Predicated region
    $region38: #{tpu_custom_call.1} parent=1 // pred_check
      _
    $region39: #{tpu_custom_call.1} parent=1 // pred_check_branch
      %301 = sbr.rel (0) target = $region41
    $region40: #{tpu_custom_call.1} parent=1 // pred_region
      %303 = vsyncadd [#allocation4], 0
      %s304 = sshll.u32 [#allocation10], 4
      %s305 = int_to_ptr.vmem [resolvable:$true] %s304
      %s306 = sshll.u32 %s5, 4
      %s307 = int_to_ptr.hbm [resolvable:$true] %s306
      %312 = dma.vmem_to_hbm [thread:$0]  %s305, 256, %s307, [#allocation4], 128, 128, 8
    $region41: #{tpu_custom_call.1} parent=1 // pred_fallthru
      _
    // Predicated region
    $region42: #{tpu_custom_call.1} parent=1 // pred_check
      _
    $region43: #{tpu_custom_call.1} parent=1 // pred_check_branch
      %314 = sbr.rel (0) target = $region45
    $region44: #{tpu_custom_call.1} parent=1 // pred_region
      %316 = dma.done [#allocation4], 256
    $region45: #{tpu_custom_call.1} parent=1 // pred_fallthru
      _
    %317 = vsyncpa [#allocation3], 1
    %318 = vsyncpa [#allocation6], 1
    %319 = vsyncpa [#allocation9], 1
    %320 = vsyncpa [#allocation4], 1

</llo_original>
